<compile_context>
chip_gen: v5e
topology: v5e:2x2
jax: 0.10.0
libtpu: 0.0.40
codegen_flags: <defaults>
</compile_context>

<pallas_src>
import jax
import jax.numpy as jnp
from jax.experimental import pallas as pl
from jax.experimental.pallas import tpu as pltpu


def _rope_kernel(x_ref, cos_ref, sin_ref, o_ref):
    # x_ref/o_ref: (bh_t, s_t, D)   cos_ref/sin_ref: (s_t, D//2)
    x = x_ref[...].astype(jnp.float32)
    half = x.shape[-1] // 2
    c = cos_ref[...].astype(jnp.float32)[None]   # (1, s_t, half)
    s = sin_ref[...].astype(jnp.float32)[None]   # (1, s_t, half)
    x1 = x[..., :half]
    x2 = x[..., half:]
    out = jnp.concatenate([x1 * c - x2 * s, x2 * c + x1 * s], axis=-1)
    o_ref[...] = out.astype(o_ref.dtype)


def make_rope_tables(seq_len: int, dim_emb: int, base: int = 10000,
                     dtype=jnp.float32):
    """Mirrors the PyTorch __init__ buffers.

    Returns (cos_full, sin_full, cos_half, sin_half); the half tables exploit
    the fact that the module duplicates the position table along D.
    """
    indices = jnp.arange(0, seq_len, dtype=jnp.float32)
    scale = 1.0 / (base ** (jnp.arange(0, dim_emb, 2, dtype=jnp.float32) / dim_emb))
    position = jnp.outer(indices, scale)                       # (S, D/2)
    position_full = jnp.concatenate([position, position], -1)  # (S, D)
    cos_full = jnp.cos(position_full).astype(dtype)
    sin_full = jnp.sin(position_full).astype(dtype)
    cos_half = jnp.cos(position).astype(dtype)
    sin_half = jnp.sin(position).astype(dtype)
    return cos_full, sin_full, cos_half, sin_half


def _pick_tiles(bh: int, s: int, d: int, itemsize: int,
                block_budget_bytes: int = 2 * 1024 * 1024):
    """Pick (bh_tile, seq_tile) so one x block is ~a few hundred KiB .. 2 MiB.

    (x + out) x 2 pipeline buffers stays well under scoped-VMEM defaults on
    v5e/v6e/v7x while amortizing the ~0.35 us/step grid overhead.  Small
    problems collapse to a single step.
    """
    budget_rows = max(8, block_budget_bytes // (d * itemsize))
    if s <= budget_rows:
        seq_tile = s                       # full seq dim -> no (8,) constraint
        bh_tile = max(1, min(bh, budget_rows // max(s, 1)))
    else:
        seq_tile = min(1024, budget_rows - (budget_rows % 8))
        seq_tile = max(8, seq_tile)
        bh_tile = 1
    return bh_tile, seq_tile


def rotary_positional_encoding(x, cos_half, sin_half):
    """x: (B, H, S, D). Half tables: (S, D//2)."""
    B, H, S, D = x.shape
    assert D % 2 == 0, "RoPE requires an even embedding dimension"
    half = D // 2
    assert cos_half.shape == (S, half)
    assert sin_half.shape == (S, half)

    BH = B * H
    xf = x.reshape(BH, S, D)
    bh_t, s_t = _pick_tiles(BH, S, D, x.dtype.itemsize)
    grid = (pl.cdiv(BH, bh_t), pl.cdiv(S, s_t))

    out = pl.pallas_call(
        _rope_kernel,
        out_shape=jax.ShapeDtypeStruct((BH, S, D), x.dtype),
        grid_spec=pl.GridSpec(
            grid=grid,
            in_specs=[
                pl.BlockSpec((bh_t, s_t, D), lambda i, j: (i, j, 0)),
                pl.BlockSpec((s_t, half), lambda i, j: (j, 0)),
                pl.BlockSpec((s_t, half), lambda i, j: (j, 0)),
            ],
            out_specs=pl.BlockSpec((bh_t, s_t, D), lambda i, j: (i, j, 0)),
        ),
        compiler_params=pltpu.CompilerParams(
            dimension_semantics=("parallel", "parallel"),
        ),
    )(xf, cos_half, sin_half)
    return out.reshape(B, H, S, D)


def _rope_ref(x, cos_full, sin_full):
    """Plain-JAX reference using the original PyTorch formulation."""
    d = x.shape[-1]
    half = d // 2
    rot = jnp.concatenate([-x[..., half:], x[..., :half]], axis=-1)
    return x * cos_full[None, None] + rot * sin_full[None, None]


if __name__ == "__main__":
    B, H, S, D = 2, 4, 16, 32  # batch, heads, seq_len, dim_emb

    key = jax.random.PRNGKey(0)
    x = jax.random.normal(key, (B, H, S, D), dtype=jnp.float32)

    cos_full, sin_full, cos_half, sin_half = make_rope_tables(
        seq_len=S, dim_emb=D, base=10000)

    out = rotary_positional_encoding(x, cos_half, sin_half)
    out = jax.block_until_ready(out)

    ref = _rope_ref(x, cos_full, sin_full)
    assert out.shape == x.shape and out.dtype == x.dtype
    assert jnp.allclose(out, ref, atol=1e-5, rtol=1e-5)

    print("KERNEL_OK")
</pallas_src>

<mosaic_0001>
module attributes {stable_mosaic.version = 11 : i64} {
  func.func @_rope_kernel(%arg0: i32, %arg1: i32, %arg2: memref<8x16x32xf32, #tpu.memory_space<vmem>>, %arg3: memref<16x16xf32, #tpu.memory_space<vmem>>, %arg4: memref<16x16xf32, #tpu.memory_space<vmem>>, %arg5: memref<8x16x32xf32, #tpu.memory_space<vmem>>) attributes {dimension_semantics = [#tpu.dimension_semantics<parallel>, #tpu.dimension_semantics<parallel>], iteration_bounds = array<i64: 1, 1>, scalar_prefetch = 0 : i64, scratch_operands = 0 : i64, tpu.core_type = #tpu.core_type<tc>, window_params = [{transform_indices = @transform_0, window_bounds = array<i64: 8, 16, 32>}, {transform_indices = @transform_1, window_bounds = array<i64: 16, 16>}, {transform_indices = @transform_2, window_bounds = array<i64: 16, 16>}, {transform_indices = @transform_3, window_bounds = array<i64: 8, 16, 32>}]} {
    %c0 = arith.constant 0 : index
    %c0_0 = arith.constant 0 : index
    %c0_1 = arith.constant 0 : index
    %0 = vector.load %arg2[%c0, %c0_0, %c0_1] : memref<8x16x32xf32, #tpu.memory_space<vmem>>, vector<8x16x32xf32>
    %c0_2 = arith.constant 0 : index
    %c0_3 = arith.constant 0 : index
    %1 = vector.load %arg3[%c0_2, %c0_3] : memref<16x16xf32, #tpu.memory_space<vmem>>, vector<16x16xf32>
    %2 = vector.shape_cast %1 : vector<16x16xf32> to vector<1x16x16xf32>
    %c0_4 = arith.constant 0 : index
    %c0_5 = arith.constant 0 : index
    %3 = vector.load %arg4[%c0_4, %c0_5] : memref<16x16xf32, #tpu.memory_space<vmem>>, vector<16x16xf32>
    %4 = vector.shape_cast %3 : vector<16x16xf32> to vector<1x16x16xf32>
    %5 = vector.extract_strided_slice %0 {offsets = [0, 0, 0], sizes = [8, 16, 16], strides = [1, 1, 1]} : vector<8x16x32xf32> to vector<8x16x16xf32>
    %6 = vector.extract_strided_slice %0 {offsets = [0, 0, 16], sizes = [8, 16, 16], strides = [1, 1, 1]} : vector<8x16x32xf32> to vector<8x16x16xf32>
    %7 = vector.broadcast %2 : vector<1x16x16xf32> to vector<8x16x16xf32>
    %8 = arith.mulf %5, %7 : vector<8x16x16xf32>
    %9 = vector.broadcast %4 : vector<1x16x16xf32> to vector<8x16x16xf32>
    %10 = arith.mulf %6, %9 : vector<8x16x16xf32>
    %11 = arith.subf %8, %10 : vector<8x16x16xf32>
    %12 = vector.broadcast %2 : vector<1x16x16xf32> to vector<8x16x16xf32>
    %13 = arith.mulf %6, %12 : vector<8x16x16xf32>
    %14 = vector.broadcast %4 : vector<1x16x16xf32> to vector<8x16x16xf32>
    %15 = arith.mulf %5, %14 : vector<8x16x16xf32>
    %16 = arith.addf %13, %15 : vector<8x16x16xf32>
    %17 = tpu.concatenate %11, %16 in 2 : vector<8x16x16xf32>, vector<8x16x16xf32> -> vector<8x16x32xf32>
    %c0_6 = arith.constant 0 : index
    %c0_7 = arith.constant 0 : index
    %c0_8 = arith.constant 0 : index
    %18 = vector.load %arg5[%c0_6, %c0_7, %c0_8] : memref<8x16x32xf32, #tpu.memory_space<vmem>>, vector<8x16x32xf32>
    tpu.vector_store %arg5[%c0_6, %c0_7, %c0_8], %17 {strides = array<i32>} : memref<8x16x32xf32, #tpu.memory_space<vmem>>, vector<8x16x32xf32>,
    return
  }
  func.func @transform_0(%arg0: i32, %arg1: i32) -> (i32, i32, i32) {
    %c0_i32 = arith.constant 0 : i32
    %c0_i32_0 = arith.constant 0 : i32
    return %arg0, %arg1, %c0_i32 : i32, i32, i32
  }
  func.func @transform_1(%arg0: i32, %arg1: i32) -> (i32, i32) {
    %c0_i32 = arith.constant 0 : i32
    %c0_i32_0 = arith.constant 0 : i32
    return %arg1, %c0_i32 : i32, i32
  }
  func.func @transform_2(%arg0: i32, %arg1: i32) -> (i32, i32) {
    %c0_i32 = arith.constant 0 : i32
    %c0_i32_0 = arith.constant 0 : i32
    return %arg1, %c0_i32 : i32, i32
  }
  func.func @transform_3(%arg0: i32, %arg1: i32) -> (i32, i32, i32) {
    %c0_i32 = arith.constant 0 : i32
    %c0_i32_0 = arith.constant 0 : i32
    return %arg0, %arg1, %c0_i32 : i32, i32, i32
  }
}

</mosaic_0001>

<llo_original>
// kernel: tpu_custom_call.1
$region0: #{tpu_custom_call.1}
  #allocation0 [shape = 'u32[]', space=smem, size = 0x4, offset = 0x4, fixed_abs, tag = 'smem constant byte address 0x4 - core index']
  #allocation1 [shape = 'u32[72,128]{1,0:T(1,128)}', space=vmem, size = 0x9000, scoped, tag = 'internal scratch']
  %s0 = inlined_call_operand.hbm [shape: f32[8,16,32], index: 0, kind: input, shape index: {}]
  %s1 = inlined_call_operand.hbm [shape: f32[16,16], index: 1, kind: input, shape index: {}]
  %s2 = inlined_call_operand.hbm [shape: f32[16,16], index: 2, kind: input, shape index: {}]
  %s3 = inlined_call_operand.hbm [shape: f32[8,16,32], index: 3, kind: output, shape index: {}]
  %s4 = sld [smem:[#allocation0]]
  $region34: #{tpu_custom_call.1} parent=0
    _
  %s6 = ssub.s32 1, %s4
  %s7 = scalar_select 0, %s6, %s4
  $region1: #{tpu_custom_call.1} parent=0
    #allocation2 [shape = 'u8[65536]{0}', space=vmem, size = 0x10000, scoped, tag = 'input window, operand 0, single buffered']
    #allocation3 [shape = 's32[1]{0}', space=sflag, size = 0x4, scoped, tag = 'scoped memory for tpu_custom_call.1']
    #allocation4 [shape = 's32[1]{0}', space=sflag, size = 0x4, scoped, tag = 'scoped memory for tpu_custom_call.1']
    #allocation5 [shape = 'u8[8192]{0}', space=vmem, size = 0x2000, scoped, tag = 'input window, operand 1, single buffered']
    #allocation6 [shape = 's32[1]{0}', space=sflag, size = 0x4, scoped, tag = 'scoped memory for tpu_custom_call.1']
    #allocation7 [shape = 'u8[8192]{0}', space=vmem, size = 0x2000, scoped, tag = 'input window, operand 2, single buffered']
    #allocation8 [shape = 'u8[65536]{0}', space=vmem, size = 0x10000, scoped, tag = 'output window, operand 0, single buffered']
    %8 = vsyncpa [#allocation3], 0
    %9 = vsyncpa [#allocation6], 0
    %10 = vsyncpa [#allocation4], 0
    // Predicated region
    $region2: #{tpu_custom_call.1} parent=1 // pred_check
      _
    $region3: #{tpu_custom_call.1} parent=1 // pred_check_branch
      %12 = sbr.rel (0) target = $region5
    $region4: #{tpu_custom_call.1} parent=1 // pred_region
      %14 = vsyncadd [#allocation3], 0
      %s15 = sshll.u32 %s0, 4
      %s16 = int_to_ptr.hbm [resolvable:$true] %s15
      %s17 = sshll.u32 [#allocation2], 4
      %s18 = int_to_ptr.vmem [resolvable:$true] %s17
      %23 = dma.hbm_to_vmem [thread:$0]  %s16, 2048, %s18, [#allocation3], 128, 128, 8
    $region5: #{tpu_custom_call.1} parent=1 // pred_fallthru
      _
    // Predicated region
    $region6: #{tpu_custom_call.1} parent=1 // pred_check
      _
    $region7: #{tpu_custom_call.1} parent=1 // pred_check_branch
      %25 = sbr.rel (0) target = $region9
    $region8: #{tpu_custom_call.1} parent=1 // pred_region
      %27 = vsyncadd [#allocation6], 0
      %s28 = sshll.u32 %s1, 4
      %s29 = int_to_ptr.hbm [resolvable:$true] %s28
      %s30 = sshll.u32 [#allocation5], 4
      %s31 = int_to_ptr.vmem [resolvable:$true] %s30
      %36 = dma.hbm_to_vmem [thread:$0]  %s29, 256, %s31, [#allocation6], 128, 128, 8
    $region9: #{tpu_custom_call.1} parent=1 // pred_fallthru
      _
    // Predicated region
    $region10: #{tpu_custom_call.1} parent=1 // pred_check
      _
    $region11: #{tpu_custom_call.1} parent=1 // pred_check_branch
      %38 = sbr.rel (0) target = $region13
    $region12: #{tpu_custom_call.1} parent=1 // pred_region
      %40 = vsyncadd [#allocation6], 0
      %s41 = sshll.u32 %s2, 4
      %s42 = int_to_ptr.hbm [resolvable:$true] %s41
      %s43 = sshll.u32 [#allocation7], 4
      %s44 = int_to_ptr.vmem [resolvable:$true] %s43
      %49 = dma.hbm_to_vmem [thread:$0]  %s42, 256, %s44, [#allocation6], 128, 128, 8
    $region13: #{tpu_custom_call.1} parent=1 // pred_fallthru
      _
    // Predicated region
    $region14: #{tpu_custom_call.1} parent=1 // pred_check
      _
    $region15: #{tpu_custom_call.1} parent=1 // pred_check_branch
      %51 = sbr.rel (0) target = $region17
    $region16: #{tpu_custom_call.1} parent=1 // pred_region
      %53 = dma.done [#allocation3], 2048
    $region17: #{tpu_custom_call.1} parent=1 // pred_fallthru
      _
    // Predicated region
    $region18: #{tpu_custom_call.1} parent=1 // pred_check
      _
    $region19: #{tpu_custom_call.1} parent=1 // pred_check_branch
      %55 = sbr.rel (0) target = $region21
    $region20: #{tpu_custom_call.1} parent=1 // pred_region
      %57 = dma.done [#allocation6], 256
    $region21: #{tpu_custom_call.1} parent=1 // pred_fallthru
      _
    // Predicated region
    $region22: #{tpu_custom_call.1} parent=1 // pred_check
      _
    $region23: #{tpu_custom_call.1} parent=1 // pred_check_branch
      %59 = sbr.rel (0) target = $region25
    $region24: #{tpu_custom_call.1} parent=1 // pred_region
      %61 = dma.done [#allocation6], 256
    $region25: #{tpu_custom_call.1} parent=1 // pred_fallthru
      _
    %v62 = vld [vmem:[#allocation2] sm:$0xff]
    %v63 = vld [vmem:[#allocation2 + $0x8] sm:$0xff]
    %v64 = vld [vmem:[#allocation2 + $0x10] sm:$0xff]
    %v65 = vld [vmem:[#allocation2 + $0x18] sm:$0xff]
    %v66 = vld [vmem:[#allocation2 + $0x20] sm:$0xff]
    %v67 = vld [vmem:[#allocation2 + $0x28] sm:$0xff]
    %v68 = vld [vmem:[#allocation2 + $0x30] sm:$0xff]
    %v69 = vld [vmem:[#allocation2 + $0x38] sm:$0xff]
    %v70 = vld [vmem:[#allocation2 + $0x40] sm:$0xff]
    %v71 = vld [vmem:[#allocation2 + $0x48] sm:$0xff]
    %v72 = vld [vmem:[#allocation2 + $0x50] sm:$0xff]
    %v73 = vld [vmem:[#allocation2 + $0x58] sm:$0xff]
    %v74 = vld [vmem:[#allocation2 + $0x60] sm:$0xff]
    %v75 = vld [vmem:[#allocation2 + $0x68] sm:$0xff]
    %v76 = vld [vmem:[#allocation2 + $0x70] sm:$0xff]
    %v77 = vld [vmem:[#allocation2 + $0x78] sm:$0xff]
    %v78 = vld [vmem:[#allocation5] sm:$0xff]
    %v79 = vld [vmem:[#allocation5 + $0x8] sm:$0xff]
    %v80 = vld [vmem:[#allocation7] sm:$0xff]
    %v81 = vld [vmem:[#allocation7 + $0x8] sm:$0xff]
    %v82 = vmul.f32 %v62, %v78
    %v83 = vmul.f32 %v63, %v79
    %v84 = vmul.f32 %v64, %v78
    %v85 = vmul.f32 %v65, %v79
    %v86 = vmul.f32 %v66, %v78
    %v87 = vmul.f32 %v67, %v79
    %v88 = vmul.f32 %v68, %v78
    %v89 = vmul.f32 %v69, %v79
    %v90 = vmul.f32 %v70, %v78
    %v91 = vmul.f32 %v71, %v79
    %v92 = vmul.f32 %v72, %v78
    %v93 = vmul.f32 %v73, %v79
    %v94 = vmul.f32 %v74, %v78
    %v95 = vmul.f32 %v75, %v79
    %v96 = vmul.f32 %v76, %v78
    %v97 = vmul.f32 %v77, %v79
    %100 = vrot.lane.b32.xlu0 %v80, 16
    %v101 = vpop.permute.xlu0 %100
    %102 = vrot.lane.b32.xlu0 %v81, 16
    %v103 = vpop.permute.xlu0 %102
    %v106 = vmul.f32 %v62, %v101
    %v107 = vmul.f32 %v63, %v103
    %v108 = vmul.f32 %v64, %v101
    %v109 = vmul.f32 %v65, %v103
    %v110 = vmul.f32 %v66, %v101
    %v111 = vmul.f32 %v67, %v103
    %v112 = vmul.f32 %v68, %v101
    %v113 = vmul.f32 %v69, %v103
    %v114 = vmul.f32 %v70, %v101
    %v115 = vmul.f32 %v71, %v103
    %v116 = vmul.f32 %v72, %v101
    %v117 = vmul.f32 %v73, %v103
    %v118 = vmul.f32 %v74, %v101
    %v119 = vmul.f32 %v75, %v103
    %v120 = vmul.f32 %v76, %v101
    %v121 = vmul.f32 %v77, %v103
    %138 = vrot.lane.b32.xlu0 %v106, 112
    %v139 = vpop.permute.xlu0 %138
    %140 = vrot.lane.b32.xlu0 %v107, 112
    %v141 = vpop.permute.xlu0 %140
    %142 = vrot.lane.b32.xlu0 %v108, 112
    %v143 = vpop.permute.xlu0 %142
    %144 = vrot.lane.b32.xlu0 %v109, 112
    %v145 = vpop.permute.xlu0 %144
    %146 = vrot.lane.b32.xlu0 %v110, 112
    %v147 = vpop.permute.xlu0 %146
    %148 = vrot.lane.b32.xlu0 %v111, 112
    %v149 = vpop.permute.xlu0 %148
    %150 = vrot.lane.b32.xlu0 %v112, 112
    %v151 = vpop.permute.xlu0 %150
    %152 = vrot.lane.b32.xlu0 %v113, 112
    %v153 = vpop.permute.xlu0 %152
    %154 = vrot.lane.b32.xlu0 %v114, 112
    %v155 = vpop.permute.xlu0 %154
    %156 = vrot.lane.b32.xlu0 %v115, 112
    %v157 = vpop.permute.xlu0 %156
    %158 = vrot.lane.b32.xlu0 %v116, 112
    %v159 = vpop.permute.xlu0 %158
    %160 = vrot.lane.b32.xlu0 %v117, 112
    %v161 = vpop.permute.xlu0 %160
    %162 = vrot.lane.b32.xlu0 %v118, 112
    %v163 = vpop.permute.xlu0 %162
    %164 = vrot.lane.b32.xlu0 %v119, 112
    %v165 = vpop.permute.xlu0 %164
    %166 = vrot.lane.b32.xlu0 %v120, 112
    %v167 = vpop.permute.xlu0 %166
    %168 = vrot.lane.b32.xlu0 %v121, 112
    %v169 = vpop.permute.xlu0 %168
    %v186 = vsub.f32 %v82, %v139
    %v187 = vsub.f32 %v83, %v141
    %v188 = vsub.f32 %v84, %v143
    %v189 = vsub.f32 %v85, %v145
    %v190 = vsub.f32 %v86, %v147
    %v191 = vsub.f32 %v87, %v149
    %v192 = vsub.f32 %v88, %v151
    %v193 = vsub.f32 %v89, %v153
    %v194 = vsub.f32 %v90, %v155
    %v195 = vsub.f32 %v91, %v157
    %v196 = vsub.f32 %v92, %v159
    %v197 = vsub.f32 %v93, %v161
    %v198 = vsub.f32 %v94, %v163
    %v199 = vsub.f32 %v95, %v165
    %v200 = vsub.f32 %v96, %v167
    %v201 = vsub.f32 %v97, %v169
    %204 = vrot.lane.b32.xlu0 %v78, 16
    %v205 = vpop.permute.xlu0 %204
    %206 = vrot.lane.b32.xlu0 %v79, 16
    %v207 = vpop.permute.xlu0 %206
    %v210 = vmul.f32 %v62, %v205
    %v211 = vmul.f32 %v63, %v207
    %v212 = vmul.f32 %v64, %v205
    %v213 = vmul.f32 %v65, %v207
    %v214 = vmul.f32 %v66, %v205
    %v215 = vmul.f32 %v67, %v207
    %v216 = vmul.f32 %v68, %v205
    %v217 = vmul.f32 %v69, %v207
    %v218 = vmul.f32 %v70, %v205
    %v219 = vmul.f32 %v71, %v207
    %v220 = vmul.f32 %v72, %v205
    %v221 = vmul.f32 %v73, %v207
    %v222 = vmul.f32 %v74, %v205
    %v223 = vmul.f32 %v75, %v207
    %v224 = vmul.f32 %v76, %v205
    %v225 = vmul.f32 %v77, %v207
    %v226 = vmul.f32 %v62, %v80
    %v227 = vmul.f32 %v63, %v81
    %v228 = vmul.f32 %v64, %v80
    %v229 = vmul.f32 %v65, %v81
    %v230 = vmul.f32 %v66, %v80
    %v231 = vmul.f32 %v67, %v81
    %v232 = vmul.f32 %v68, %v80
    %v233 = vmul.f32 %v69, %v81
    %v234 = vmul.f32 %v70, %v80
    %v235 = vmul.f32 %v71, %v81
    %v236 = vmul.f32 %v72, %v80
    %v237 = vmul.f32 %v73, %v81
    %v238 = vmul.f32 %v74, %v80
    %v239 = vmul.f32 %v75, %v81
    %v240 = vmul.f32 %v76, %v80
    %v241 = vmul.f32 %v77, %v81
    %258 = vrot.lane.b32.xlu0 %v226, 16
    %v259 = vpop.permute.xlu0 %258
    %260 = vrot.lane.b32.xlu0 %v227, 16
    %v261 = vpop.permute.xlu0 %260
    %262 = vrot.lane.b32.xlu0 %v228, 16
    %v263 = vpop.permute.xlu0 %262
    %264 = vrot.lane.b32.xlu0 %v229, 16
    %v265 = vpop.permute.xlu0 %264
    %266 = vrot.lane.b32.xlu0 %v230, 16
    %v267 = vpop.permute.xlu0 %266
    %268 = vrot.lane.b32.xlu0 %v231, 16
    %v269 = vpop.permute.xlu0 %268
    %270 = vrot.lane.b32.xlu0 %v232, 16
    %v271 = vpop.permute.xlu0 %270
    %272 = vrot.lane.b32.xlu0 %v233, 16
    %v273 = vpop.permute.xlu0 %272
    %274 = vrot.lane.b32.xlu0 %v234, 16
    %v275 = vpop.permute.xlu0 %274
    %276 = vrot.lane.b32.xlu0 %v235, 16
    %v277 = vpop.permute.xlu0 %276
    %278 = vrot.lane.b32.xlu0 %v236, 16
    %v279 = vpop.permute.xlu0 %278
    %280 = vrot.lane.b32.xlu0 %v237, 16
    %v281 = vpop.permute.xlu0 %280
    %282 = vrot.lane.b32.xlu0 %v238, 16
    %v283 = vpop.permute.xlu0 %282
    %284 = vrot.lane.b32.xlu0 %v239, 16
    %v285 = vpop.permute.xlu0 %284
    %286 = vrot.lane.b32.xlu0 %v240, 16
    %v287 = vpop.permute.xlu0 %286
    %288 = vrot.lane.b32.xlu0 %v241, 16
    %v289 = vpop.permute.xlu0 %288
    %v306 = vadd.f32 %v210, %v259
    %v307 = vadd.f32 %v211, %v261
    %v308 = vadd.f32 %v212, %v263
    %v309 = vadd.f32 %v213, %v265
    %v310 = vadd.f32 %v214, %v267
    %v311 = vadd.f32 %v215, %v269
    %v312 = vadd.f32 %v216, %v271
    %v313 = vadd.f32 %v217, %v273
    %v314 = vadd.f32 %v218, %v275
    %v315 = vadd.f32 %v219, %v277
    %v316 = vadd.f32 %v220, %v279
    %v317 = vadd.f32 %v221, %v281
    %v318 = vadd.f32 %v222, %v283
    %v319 = vadd.f32 %v223, %v285
    %v320 = vadd.f32 %v224, %v287
    %v321 = vadd.f32 %v225, %v289
    %vm322 = vcmask 130048
    %v323 = vsel %vm322, %v186, %v306
    %v324 = vsel %vm322, %v187, %v307
    %v325 = vsel %vm322, %v188, %v308
    %v326 = vsel %vm322, %v189, %v309
    %v327 = vsel %vm322, %v190, %v310
    %v328 = vsel %vm322, %v191, %v311
    %v329 = vsel %vm322, %v192, %v312
    %v330 = vsel %vm322, %v193, %v313
    %v331 = vsel %vm322, %v194, %v314
    %v332 = vsel %vm322, %v195, %v315
    %v333 = vsel %vm322, %v196, %v316
    %v334 = vsel %vm322, %v197, %v317
    %v335 = vsel %vm322, %v198, %v318
    %v336 = vsel %vm322, %v199, %v319
    %v337 = vsel %vm322, %v200, %v320
    %v338 = vsel %vm322, %v201, %v321
    %vm339 = vcmask 261120
    %340 = vst.msk [vmem:[#allocation8] sm:$0xff] %vm339, %v323
    %341 = vst.msk [vmem:[#allocation8 + $0x8] sm:$0xff] %vm339, %v324
    %342 = vst.msk [vmem:[#allocation8 + $0x10] sm:$0xff] %vm339, %v325
    %343 = vst.msk [vmem:[#allocation8 + $0x18] sm:$0xff] %vm339, %v326
    %344 = vst.msk [vmem:[#allocation8 + $0x20] sm:$0xff] %vm339, %v327
    %345 = vst.msk [vmem:[#allocation8 + $0x28] sm:$0xff] %vm339, %v328
    %346 = vst.msk [vmem:[#allocation8 + $0x30] sm:$0xff] %vm339, %v329
    %347 = vst.msk [vmem:[#allocation8 + $0x38] sm:$0xff] %vm339, %v330
    %348 = vst.msk [vmem:[#allocation8 + $0x40] sm:$0xff] %vm339, %v331
    %349 = vst.msk [vmem:[#allocation8 + $0x48] sm:$0xff] %vm339, %v332
    %350 = vst.msk [vmem:[#allocation8 + $0x50] sm:$0xff] %vm339, %v333
    %351 = vst.msk [vmem:[#allocation8 + $0x58] sm:$0xff] %vm339, %v334
    %352 = vst.msk [vmem:[#allocation8 + $0x60] sm:$0xff] %vm339, %v335
    %353 = vst.msk [vmem:[#allocation8 + $0x68] sm:$0xff] %vm339, %v336
    %354 = vst.msk [vmem:[#allocation8 + $0x70] sm:$0xff] %vm339, %v337
    %355 = vst.msk [vmem:[#allocation8 + $0x78] sm:$0xff] %vm339, %v338
    // Predicated region
    $region26: #{tpu_custom_call.1} parent=1 // pred_check
      _
    $region27: #{tpu_custom_call.1} parent=1 // pred_check_branch
      %357 = sbr.rel (0) target = $region29
    $region28: #{tpu_custom_call.1} parent=1 // pred_region
      %359 = vsyncadd [#allocation4], 0
      %s360 = sshll.u32 [#allocation8], 4
      %s361 = int_to_ptr.vmem [resolvable:$true] %s360
      %s362 = sshll.u32 %s3, 4
      %s363 = int_to_ptr.hbm [resolvable:$true] %s362
      %368 = dma.vmem_to_hbm [thread:$0]  %s361, 2048, %s363, [#allocation4], 128, 128, 8
    $region29: #{tpu_custom_call.1} parent=1 // pred_fallthru
      _
    // Predicated region
    $region30: #{tpu_custom_call.1} parent=1 // pred_check
      _
    $region31: #{tpu_custom_call.1} parent=1 // pred_check_branch
      %370 = sbr.rel (0) target = $region33
    $region32: #{tpu_custom_call.1} parent=1 // pred_region
      %372 = dma.done [#allocation4], 2048
    $region33: #{tpu_custom_call.1} parent=1 // pred_fallthru
      _
    %373 = vsyncpa [#allocation3], 1
    %374 = vsyncpa [#allocation6], 1
    %375 = vsyncpa [#allocation4], 1

</llo_original>
